<compile_context>
chip_gen: v7x
topology: tpu7x:2x2x1
jax: 0.10.0
libtpu: 0.0.40
codegen_flags: <defaults>
</compile_context>

<pallas_src>
import jax
import jax.numpy as jnp
from jax.experimental import pallas as pl
from jax.experimental.pallas import tpu as pltpu

_LANES = 128
# ~2 MiB per block; with in+out double-buffered that is ~8 MiB of VMEM,
# comfortably under scoped-VMEM defaults (16 MiB v5e, 32 MiB v6e/v7x).
_TARGET_BLOCK_BYTES = 2 << 20
# Candidate lane widths (largest first). Wider last dim -> denser stores and
# fewer DMA descriptors per block.
_COL_CANDIDATES = (2048, 1024, 512, 256, 128)


def _h_sigmoid_kernel(x_ref, o_ref):
    x = x_ref[...]
    # relu6(x + 3) / 6  == clamp(x + 3, 0, 6) * (1/6)
    o_ref[...] = (jnp.clip(x + 3.0, 0.0, 6.0) * (1.0 / 6.0)).astype(o_ref.dtype)


def h_sigmoid(x, *, block_rows=None):
    """Elementwise hard-sigmoid matching torch: relu6(x + 3) / 6."""
    orig_shape = x.shape
    dtype = x.dtype
    itemsize = jnp.dtype(dtype).itemsize
    # Full-vreg sublane packing: 8 rows for f32, 16 for bf16, 32 for int8/fp8.
    sublane_mult = max(8, 32 // itemsize)

    total = x.size
    needs_pad = (total % _LANES) != 0
    if needs_pad:
        # Rare fallback: one pad pass (and a trailing slice on the output).
        cols = _LANES
        rows = pl.cdiv(total, cols)
        x2d = jnp.pad(x.reshape(-1), (0, rows * cols - total)).reshape(rows, cols)
    else:
        # Common case: pick the widest lane-dense layout; metadata-only reshape.
        cols = next(c for c in _COL_CANDIDATES if total % c == 0)
        rows = total // cols
        x2d = x.reshape(rows, cols)

    if block_rows is None:
        if rows <= sublane_mult:
            # Tiny input: single block covering the full array (valid tiling).
            block_rows = rows
        else:
            max_rows = max(sublane_mult, _TARGET_BLOCK_BYTES // (cols * itemsize))
            # Keep at least 2 grid steps so the 'parallel' axis can be sharded
            # across v7x's two TensorCores.
            br = min(max_rows, rows // 2)
            block_rows = max(sublane_mult, (br // sublane_mult) * sublane_mult)

    grid = (pl.cdiv(rows, block_rows),)

    out2d = pl.pallas_call(
        _h_sigmoid_kernel,
        out_shape=jax.ShapeDtypeStruct((rows, cols), dtype),
        grid_spec=pltpu.PrefetchScalarGridSpec(
            num_scalar_prefetch=0,
            grid=grid,
            in_specs=[pl.BlockSpec((block_rows, cols), lambda i: (i, 0))],
            out_specs=pl.BlockSpec((block_rows, cols), lambda i: (i, 0)),
        ),
        compiler_params=pltpu.CompilerParams(
            dimension_semantics=("parallel",),
        ),
    )(x2d)

    if needs_pad:
        return out2d.reshape(-1)[:total].reshape(orig_shape)
    return out2d.reshape(orig_shape)


if __name__ == "__main__":
    key = jax.random.PRNGKey(0)

    # Main case: NCHW input (batch=2, channels=4, spatial=16x16) -> numel % 128 == 0,
    # so no padding pass and a wide lane-dense layout is used.
    x = jax.random.normal(key, (2, 4, 16, 16), dtype=jnp.float32) * 4.0
    y = jax.block_until_ready(h_sigmoid(x))
    y_ref = jnp.clip(x + 3.0, 0.0, 6.0) / 6.0
    assert y.shape == x.shape and y.dtype == x.dtype
    assert jnp.allclose(y, y_ref, atol=1e-6, rtol=1e-6)

    # Fallback case: numel not a multiple of 128 (exercises the pad + partial-block path).
    key2 = jax.random.PRNGKey(1)
    x2 = jax.random.normal(key2, (2, 3, 20, 20), dtype=jnp.float32) * 4.0
    y2 = jax.block_until_ready(h_sigmoid(x2))
    y2_ref = jnp.clip(x2 + 3.0, 0.0, 6.0) / 6.0
    assert y2.shape == x2.shape and y2.dtype == x2.dtype
    assert jnp.allclose(y2, y2_ref, atol=1e-6, rtol=1e-6)

    # bf16 sanity (sublane packing path: 16-row multiples).
    x3 = (jax.random.normal(jax.random.PRNGKey(2), (2, 4, 16, 16)) * 4.0).astype(jnp.bfloat16)
    y3 = jax.block_until_ready(h_sigmoid(x3))
    y3_ref = (jnp.clip(x3 + 3.0, 0.0, 6.0) / 6.0).astype(jnp.bfloat16)
    assert y3.dtype == jnp.bfloat16 and jnp.allclose(
        y3.astype(jnp.float32), y3_ref.astype(jnp.float32), atol=1e-2, rtol=1e-2
    )

    print("KERNEL_OK")
</pallas_src>

<mosaic_0001>
module attributes {stable_mosaic.version = 11 : i64} {
  func.func @_h_sigmoid_kernel(%arg0: i32, %arg1: memref<1x2048xf32, #tpu.memory_space<vmem>>, %arg2: memref<1x2048xf32, #tpu.memory_space<vmem>>) attributes {dimension_semantics = [#tpu.dimension_semantics<parallel>], iteration_bounds = array<i64: 1>, scalar_prefetch = 0 : i64, scratch_operands = 0 : i64, tpu.core_type = #tpu.core_type<tc>, window_params = [{transform_indices = @transform_0, window_bounds = array<i64: 1, 2048>}, {transform_indices = @transform_1, window_bounds = array<i64: 1, 2048>}]} {
    %c0 = arith.constant 0 : index
    %c0_0 = arith.constant 0 : index
    %0 = vector.load %arg1[%c0, %c0_0] : memref<1x2048xf32, #tpu.memory_space<vmem>>, vector<1x2048xf32>
    %cst = arith.constant 3.000000e+00 : f32
    %1 = vector.broadcast %cst : f32 to vector<1x2048xf32>
    %2 = arith.addf %0, %1 : vector<1x2048xf32>
    %cst_1 = arith.constant 0.000000e+00 : f32
    %cst_2 = arith.constant 6.000000e+00 : f32
    %3 = vector.broadcast %cst_1 : f32 to vector<1x2048xf32>
    %4 = arith.maximumf %3, %2 : vector<1x2048xf32>
    %5 = vector.broadcast %cst_2 : f32 to vector<1x2048xf32>
    %6 = arith.minimumf %5, %4 : vector<1x2048xf32>
    %cst_3 = arith.constant 0.166666672 : f32
    %7 = vector.broadcast %cst_3 : f32 to vector<1x2048xf32>
    %8 = arith.mulf %6, %7 : vector<1x2048xf32>
    %c0_4 = arith.constant 0 : index
    %c0_5 = arith.constant 0 : index
    %9 = vector.load %arg2[%c0_4, %c0_5] : memref<1x2048xf32, #tpu.memory_space<vmem>>, vector<1x2048xf32>
    tpu.vector_store %arg2[%c0_4, %c0_5], %8 {strides = array<i32>} : memref<1x2048xf32, #tpu.memory_space<vmem>>, vector<1x2048xf32>,
    return
  }
  func.func @transform_0(%arg0: i32) -> (i32, i32) {
    %c0_i32 = arith.constant 0 : i32
    %c0_i32_0 = arith.constant 0 : i32
    return %arg0, %c0_i32 : i32, i32
  }
  func.func @transform_1(%arg0: i32) -> (i32, i32) {
    %c0_i32 = arith.constant 0 : i32
    %c0_i32_0 = arith.constant 0 : i32
    return %arg0, %c0_i32 : i32, i32
  }
}

</mosaic_0001>

<llo_original>
// kernel: tpu_custom_call.1
$region0: #{tpu_custom_call.1}
  #allocation0 [shape = 'u32[]', space=smem, size = 0x4, offset = 0x4, fixed_abs, tag = 'smem constant byte address 0x4 - core index']
  #allocation1 [shape = 'u32[144,128]{1,0:T(1,128)}', space=vmem, size = 0x12000, scoped, tag = 'internal scratch']
  %s0 = inlined_call_operand.hbm [shape: f32[1,2048], index: 0, kind: input, shape index: {}]
  %s1 = inlined_call_operand.hbm [shape: f32[1,2048], index: 1, kind: output, shape index: {}]
  %s2 = sld [smem:[#allocation0]]
  $region18: #{tpu_custom_call.1} parent=0
    _
  %s4 = ssub.s32 1, %s2
  %s5 = scalar_select 0, %s4, %s2
  $region1: #{tpu_custom_call.1} parent=0
    #allocation2 [shape = 'u8[8192]{0}', space=vmem, size = 0x2000, scoped, tag = 'input window, operand 0, single buffered']
    #allocation3 [shape = 's32[1]{0}', space=sflag, size = 0x4, scoped, tag = 'scoped memory for tpu_custom_call.1']
    #allocation4 [shape = 's32[1]{0}', space=sflag, size = 0x4, scoped, tag = 'scoped memory for tpu_custom_call.1']
    #allocation5 [shape = 'u8[8192]{0}', space=vmem, size = 0x2000, scoped, tag = 'output window, operand 0, single buffered']
    %6 = vsyncpa [#allocation3], 0
    %7 = vsyncpa [#allocation4], 0
    // Predicated region
    $region2: #{tpu_custom_call.1} parent=1 // pred_check
      _
    $region3: #{tpu_custom_call.1} parent=1 // pred_check_branch
      %9 = sbr.rel (0) target = $region5
    $region4: #{tpu_custom_call.1} parent=1 // pred_region
      %s11 = ssub.s32 256, 256
      %12 = vsyncadd [#allocation3], %s11
      %s14 = sshll.u32 [#allocation2], 4
      %s15 = int_to_ptr.vmem [resolvable:$true] %s14
      %17 = dma.hbm_to_vmem [thread:$0]  %s0, 256, %s15, [#allocation3]
    $region5: #{tpu_custom_call.1} parent=1 // pred_fallthru
      _
    // Predicated region
    $region6: #{tpu_custom_call.1} parent=1 // pred_check
      _
    $region7: #{tpu_custom_call.1} parent=1 // pred_check_branch
      %19 = sbr.rel (0) target = $region9
    $region8: #{tpu_custom_call.1} parent=1 // pred_region
      %20 = dma.done [#allocation3], 256
    $region9: #{tpu_custom_call.1} parent=1 // pred_fallthru
      _
    %v21 = vld [vmem:[#allocation2] sm:$0xff]
    %v22 = vld [vmem:[#allocation2 + $0x8] sm:$0xff]
    %v23 = vadd.f32 %v21, 3.0
    %v24 = vadd.f32 %v22, 3.0
    %v25 = vmax.f32 %v23, 0.0
    %v26 = vmax.f32 %v24, 0.0
    %v27 = vmin.f32 %v25, 6.0
    %v28 = vmin.f32 %v26, 6.0
    %v29 = vmul.f32 %v27, 0.16666667
    %v30 = vmul.f32 %v28, 0.16666667
    %31 = vst [vmem:[#allocation5] sm:$0xff] %v29
    %32 = vst [vmem:[#allocation5 + $0x8] sm:$0xff] %v30
    // Predicated region
    $region10: #{tpu_custom_call.1} parent=1 // pred_check
      _
    $region11: #{tpu_custom_call.1} parent=1 // pred_check_branch
      %34 = sbr.rel (0) target = $region13
    $region12: #{tpu_custom_call.1} parent=1 // pred_region
      %s36 = ssub.s32 256, 256
      %37 = vsyncadd [#allocation4], %s36
      %s39 = sshll.u32 [#allocation5], 4
      %s40 = int_to_ptr.vmem [resolvable:$true] %s39
      %42 = dma.vmem_to_hbm [thread:$0]  %s40, 256, %s1, [#allocation4]
    $region13: #{tpu_custom_call.1} parent=1 // pred_fallthru
      _
    // Predicated region
    $region14: #{tpu_custom_call.1} parent=1 // pred_check
      _
    $region15: #{tpu_custom_call.1} parent=1 // pred_check_branch
      %44 = sbr.rel (0) target = $region17
    $region16: #{tpu_custom_call.1} parent=1 // pred_region
      %45 = dma.done [#allocation4], 256
    $region17: #{tpu_custom_call.1} parent=1 // pred_fallthru
      _
    %46 = vsyncpa [#allocation3], 1
    %47 = vsyncpa [#allocation4], 1

</llo_original>
